<compile_context>
chip_gen: v5e
topology: v5e:2x2
jax: 0.10.0
libtpu: 0.0.40
codegen_flags: <defaults>
</compile_context>

<pallas_src>
import jax
import jax.numpy as jnp
from jax import lax
from jax.experimental import pallas as pl
from jax.experimental.pallas import tpu as pltpu


# ---------------------------------------------------------------------------
# Pre-pass: hidden = relu(x_avg^T @ (x_avg @ A^T))            -> (Din, rank)
# ---------------------------------------------------------------------------
# Cheap: O(S*Din*rank) FLOPs, one read of x.  Grid-less is fine because the
# result is tiny and x is read exactly once here.
# TODO(synk): for very large B*S this pre-pass could be tiled over S with an
# accumulating mean; unnecessary at any realistic layer size.
def _hidden_prepass_kernel(x_ref, at_ref, hid_ref):
    x = x_ref[...]                                        # (B, S, Din) f32
    x_avg = jnp.mean(x, axis=0)                           # (S, Din)
    # tmp = x_avg @ A^T  (A passed pre-transposed as A_t = (Din, rank))
    tmp = jnp.dot(x_avg, at_ref[...],
                  preferred_element_type=jnp.float32)     # (S, rank)
    # hidden = relu(x_avg^T @ tmp) == relu((x_avg^T x_avg) @ A^T)   (exact)
    hid = lax.dot_general(x_avg, tmp, (((0,), (0,)), ((), ())),
                          preferred_element_type=jnp.float32)       # (Din, rank)
    hid_ref[...] = jnp.maximum(hid, 0.0)


def _compute_hidden(x, a_t):
    Bsz, S, Din = x.shape
    rank = a_t.shape[1]
    return pl.pallas_call(
        _hidden_prepass_kernel,
        out_shape=jax.ShapeDtypeStruct((Din, rank), jnp.float32),
        in_specs=[
            pl.BlockSpec((Bsz, S, Din), lambda: (0, 0, 0)),
            pl.BlockSpec((Din, rank), lambda: (0, 0)),
        ],
        out_specs=pl.BlockSpec((Din, rank), lambda: (0, 0)),
    )(x, a_t)


# ---------------------------------------------------------------------------
# Main kernel: out = x2d @ (W^T + hidden @ B^T) + bias, tiled (i, j, k)
# ---------------------------------------------------------------------------
def _fused_linear_kernel(x_ref, wt_ref, hid_ref, bt_ref, bias_ref,
                         out_ref, acc_ref):
    k = pl.program_id(2)

    @pl.when(k == 0)
    def _init():
        acc_ref[...] = jnp.zeros_like(acc_ref)

    # Fold the low-rank delta into this (TK, TN) weight tile; rank is tiny so
    # this thin matmul is negligible and the main contraction stays dense.
    delta = jnp.dot(hid_ref[...], bt_ref[...],
                    preferred_element_type=jnp.float32)              # (TK, TN)
    w_eff = (wt_ref[...].astype(jnp.float32) + delta).astype(x_ref.dtype)

    acc_ref[...] += jnp.dot(x_ref[...], w_eff,
                            preferred_element_type=jnp.float32)      # (TM, TN)

    @pl.when(k == pl.num_programs(2) - 1)
    def _finalize():
        # Minimal epilogue: one add (bias broadcast), one cast, one store.
        out_ref[...] = (acc_ref[...] + bias_ref[...]).astype(out_ref.dtype)


def _pick_tile(dim, target, align):
    """Largest tile <= target that is a multiple of `align` and divides `dim`;
    falls back to the full dim (full-extent blocks are always legal)."""
    if dim <= target:
        return dim
    t = (target // align) * align
    while t >= align:
        if dim % t == 0:
            return t
        t -= align
    return dim


def custom_linear_forward(x, A, Bm, W, bias, *,
                          use_bf16_matmul=False,
                          out_dtype=jnp.float32,
                          tm=None, tn=None, tk=None):
    """x: (B, S, Din); A: (rank, Din); Bm: (Dout, rank); W: (Dout, Din); bias: (Dout,) or None."""
    Bsz, S, Din = x.shape
    Dout, rank = Bm.shape
    M = Bsz * S

    # ---- wrapper-side layout prep (free plumbing; avoids in-kernel transposes)
    a_t = A.T.astype(jnp.float32)          # (Din, rank)
    b_t = Bm.T.astype(jnp.float32)         # (rank, Dout)
    w_t = W.T                              # (Din, Dout)
    if bias is None:
        bias = jnp.zeros((Dout,), jnp.float32)
    bias2d = bias.reshape(1, Dout).astype(jnp.float32)

    # ---- pre-pass: low-rank `hidden` from the full-batch mean (exact once)
    hidden = _compute_hidden(x.astype(jnp.float32), a_t)   # (Din, rank) f32

    # ---- main matmul operands (leading-axis merge of x is a layout no-op)
    x2d = x.reshape(M, Din)
    if use_bf16_matmul:
        # bf16 MXU operands (f32 accumulation); cast in the wrapper so DMA
        # bytes and VMEM footprint halve and no per-tile VPU cast is needed.
        x2d = x2d.astype(jnp.bfloat16)
        w_t = w_t.astype(jnp.bfloat16)
    else:
        x2d = x2d.astype(jnp.float32)
        w_t = w_t.astype(jnp.float32)

    # ---- tile sizes: big enough to amortize per-step overhead, small enough
    # to fit v7x's 64 MiB VMEM with double-buffering (budget here is a few MiB).
    tm = tm if tm is not None else _pick_tile(M, 256, 8)
    tn = tn if tn is not None else _pick_tile(Dout, 512, 128)
    tk = tk if tk is not None else _pick_tile(Din, 512, 128)
    assert M % tm == 0 and Dout % tn == 0 and Din % tk == 0, "tiles must divide dims"
    grid = (M // tm, Dout // tn, Din // tk)   # reduction axis (k) last

    out2d = pl.pallas_call(
        _fused_linear_kernel,
        out_shape=jax.ShapeDtypeStruct((M, Dout), out_dtype),
        grid_spec=pltpu.PrefetchScalarGridSpec(
            num_scalar_prefetch=0,
            grid=grid,
            in_specs=[
                pl.BlockSpec((tm, tk), lambda i, j, k: (i, k)),     # x2d
                pl.BlockSpec((tk, tn), lambda i, j, k: (k, j)),     # W^T
                pl.BlockSpec((tk, rank), lambda i, j, k: (k, 0)),   # hidden
                pl.BlockSpec((rank, tn), lambda i, j, k: (0, j)),   # B^T
                pl.BlockSpec((1, tn), lambda i, j, k: (0, j)),      # bias
            ],
            out_specs=pl.BlockSpec((tm, tn), lambda i, j, k: (i, j)),
            scratch_shapes=[pltpu.VMEM((tm, tn), jnp.float32)],
        ),
        compiler_params=pltpu.CompilerParams(
            # i, j independent -> shard across v7x's two TensorCores; k is the
            # accumulation axis over the resident output block.
            dimension_semantics=("parallel", "parallel", "arbitrary"),
            vmem_limit_bytes=48 * 1024 * 1024,
        ),
    )(x2d, w_t, hidden, b_t, bias2d)

    return out2d.reshape(Bsz, S, Dout)


if __name__ == "__main__":
    # Small shapes consistent with the module: x is (batch, seq, in_features).
    # Din/Dout chosen lane-dense (multiples of 128) and large enough that the
    # self-test tiles below exercise a real (2, 1, 2) grid with accumulation.
    Bsz, S, Din, Dout, rank = 2, 8, 256, 128, 4

    key = jax.random.PRNGKey(0)
    k_x, k_w, k_a, k_b, k_bias = jax.random.split(key, 5)

    x = jax.random.normal(k_x, (Bsz, S, Din), jnp.float32)
    W = jax.random.normal(k_w, (Dout, Din), jnp.float32) * 0.1
    # NOTE: the PyTorch module initializes A to zeros (low-rank path = 0);
    # randomize here so the bias-tuning path is actually exercised numerically.
    A = jax.random.normal(k_a, (rank, Din), jnp.float32) * 0.05
    Bm = jax.random.normal(k_b, (Dout, rank), jnp.float32) * 0.05
    bias = jax.random.normal(k_bias, (Dout,), jnp.float32) * 0.1

    # Small explicit tiles so the k-reduction / pl.when init-finalize path runs.
    out = custom_linear_forward(x, A, Bm, W, bias, tm=8, tn=128, tk=128)
    out = jax.block_until_ready(out)

    # Pure-JAX reference (original, un-reassociated math).
    x_avg = x.mean(axis=0)
    result = x_avg.T @ x_avg
    hidden_ref = jnp.maximum(result @ A.T, 0.0)
    bias_matrix = hidden_ref @ Bm.T
    w_eff = W + bias_matrix.T
    ref = x @ w_eff.T + bias

    assert out.shape == (Bsz, S, Dout)
    assert jnp.allclose(out, ref, atol=1e-3, rtol=1e-3), (
        "mismatch vs reference, max abs diff = "
        f"{float(jnp.max(jnp.abs(out - ref)))}")
    print("KERNEL_OK")
</pallas_src>

<mosaic_0001>
module attributes {stable_mosaic.version = 11 : i64} {
  func.func @_hidden_prepass_kernel(%arg0: memref<2x8x256xf32, #tpu.memory_space<vmem>>, %arg1: memref<256x4xf32, #tpu.memory_space<vmem>>, %arg2: memref<256x4xf32, #tpu.memory_space<vmem>>) attributes {dimension_semantics = [], scalar_prefetch = 0 : i64, scratch_operands = 0 : i64, tpu.core_type = #tpu.core_type<tc>} {
    %c0 = arith.constant 0 : index
    %c0_0 = arith.constant 0 : index
    %c0_1 = arith.constant 0 : index
    %0 = vector.load %arg0[%c0, %c0_0, %c0_1] : memref<2x8x256xf32, #tpu.memory_space<vmem>>, vector<2x8x256xf32>
    %cst = arith.constant dense<0.000000e+00> : vector<8x256xf32>
    %1 = vector.multi_reduction <add>, %0, %cst [0] : vector<2x8x256xf32> to vector<8x256xf32>
    %cst_2 = arith.constant 2.000000e+00 : f32
    %2 = vector.broadcast %cst_2 : f32 to vector<8x256xf32>
    %3 = arith.divf %1, %2 : vector<8x256xf32>
    %c0_3 = arith.constant 0 : index
    %c0_4 = arith.constant 0 : index
    %4 = vector.load %arg1[%c0_3, %c0_4] : memref<256x4xf32, #tpu.memory_space<vmem>>, vector<256x4xf32>
    %cst_5 = arith.constant dense<0.000000e+00> : vector<8x4xf32>
    %5 = tpu.matmul %3, %4, %cst_5 {dimension_numbers = #tpu.dot_dimension_numbers<[1], [0], [0], [1], [0, 0, 1, 1], [], []>} : vector<8x256xf32>, vector<256x4xf32>, vector<8x4xf32> -> vector<8x4xf32>
    %cst_6 = arith.constant dense<0.000000e+00> : vector<256x4xf32>
    %6 = tpu.matmul %3, %5, %cst_6 {dimension_numbers = #tpu.dot_dimension_numbers<[0], [0], [1], [1], [0, 1, 1, 1], [], []>} : vector<8x256xf32>, vector<8x4xf32>, vector<256x4xf32> -> vector<256x4xf32>
    %cst_7 = arith.constant 0.000000e+00 : f32
    %7 = vector.broadcast %cst_7 : f32 to vector<256x4xf32>
    %8 = arith.maximumf %6, %7 : vector<256x4xf32>
    %c0_8 = arith.constant 0 : index
    %c0_9 = arith.constant 0 : index
    %9 = vector.load %arg2[%c0_8, %c0_9] : memref<256x4xf32, #tpu.memory_space<vmem>>, vector<256x4xf32>
    tpu.vector_store %arg2[%c0_8, %c0_9], %8 {strides = array<i32>} : memref<256x4xf32, #tpu.memory_space<vmem>>, vector<256x4xf32>,
    return
  }
}

</mosaic_0001>

<llo_original>
// kernel: tpu_custom_call.1
$region0: #{tpu_custom_call.1}
  #allocation0 [shape = 'u32[]', space=smem, size = 0x4, offset = 0x4, fixed_abs, tag = 'smem constant byte address 0x4 - core index']
  #allocation1 [shape = 'u32[72,128]{1,0:T(1,128)}', space=vmem, size = 0x9000, scoped, tag = 'internal scratch']
  %s0 = inlined_call_operand.vmem [shape: f32[2,8,256], index: 0, kind: input, shape index: {}]
  %s1 = inlined_call_operand.vmem [shape: f32[256,4], index: 1, kind: input, shape index: {}]
  %s2 = inlined_call_operand.vmem [shape: f32[256,4], index: 2, kind: output, shape index: {}]
  %s3 = sld [smem:[#allocation0]]
  $region18: #{tpu_custom_call.1} parent=0
    _
  %s5 = ssub.s32 1, %s3
  %s6 = scalar_select 0, %s5, %s3
  // Predicated region
  $region2: #{tpu_custom_call.1} parent=0 // pred_check
    _
  $region3: #{tpu_custom_call.1} parent=0 // pred_check_branch
    %8 = sbr.rel (0) target = $region5
  $region4: #{tpu_custom_call.1} parent=0 // pred_region
    _
  $region5: #{tpu_custom_call.1} parent=0 // pred_fallthru
    _
  // Predicated region
  $region6: #{tpu_custom_call.1} parent=0 // pred_check
    _
  $region7: #{tpu_custom_call.1} parent=0 // pred_check_branch
    %10 = sbr.rel (0) target = $region9
  $region8: #{tpu_custom_call.1} parent=0 // pred_region
    _
  $region9: #{tpu_custom_call.1} parent=0 // pred_fallthru
    _
  %v11 = vld [vmem:[%s0] sm:$0xff]
  %v12 = vld [vmem:[%s0 + $0x8] sm:$0xff]
  %v13 = vld [vmem:[%s0 + $0x10] sm:$0xff]
  %v14 = vld [vmem:[%s0 + $0x18] sm:$0xff]
  %v15 = vadd.f32 %v11, %v13
  %v16 = vadd.f32 %v12, %v14
  %v17 = vrcp.pop 2.0
  %v18 = vmul.f32 2.0, %v17
  %v19 = vsub.f32 1.0, %v18
  %v20 = vmul.f32 %v17, %v19
  %v21 = vadd.f32 %v17, %v20
  %vm22 = vweird.f32 %v17
  %v23 = vsel %vm22, %v17, %v21
  %v24 = vmul.f32 %v15, %v23
  %v25 = vmul.f32 %v16, %v23
  %v26 = vld [vmem:[%s1] sm:$0xff]
  %v27 = vld [vmem:[%s1 + $0x8] sm:$0xff]
  %v28 = vld [vmem:[%s1 + $0x10] sm:$0xff]
  %v29 = vld [vmem:[%s1 + $0x18] sm:$0xff]
  %v30 = vld [vmem:[%s1 + $0x20] sm:$0xff]
  %v31 = vld [vmem:[%s1 + $0x28] sm:$0xff]
  %v32 = vld [vmem:[%s1 + $0x30] sm:$0xff]
  %v33 = vld [vmem:[%s1 + $0x38] sm:$0xff]
  %v34 = vld [vmem:[%s1 + $0x40] sm:$0xff]
  %v35 = vld [vmem:[%s1 + $0x48] sm:$0xff]
  %v36 = vld [vmem:[%s1 + $0x50] sm:$0xff]
  %v37 = vld [vmem:[%s1 + $0x58] sm:$0xff]
  %v38 = vld [vmem:[%s1 + $0x60] sm:$0xff]
  %v39 = vld [vmem:[%s1 + $0x68] sm:$0xff]
  %v40 = vld [vmem:[%s1 + $0x70] sm:$0xff]
  %v41 = vld [vmem:[%s1 + $0x78] sm:$0xff]
  %v42 = vld [vmem:[%s1 + $0x80] sm:$0xff]
  %v43 = vld [vmem:[%s1 + $0x88] sm:$0xff]
  %v44 = vld [vmem:[%s1 + $0x90] sm:$0xff]
  %v45 = vld [vmem:[%s1 + $0x98] sm:$0xff]
  %v46 = vld [vmem:[%s1 + $0xa0] sm:$0xff]
  %v47 = vld [vmem:[%s1 + $0xa8] sm:$0xff]
  %v48 = vld [vmem:[%s1 + $0xb0] sm:$0xff]
  %v49 = vld [vmem:[%s1 + $0xb8] sm:$0xff]
  %v50 = vld [vmem:[%s1 + $0xc0] sm:$0xff]
  %v51 = vld [vmem:[%s1 + $0xc8] sm:$0xff]
  %v52 = vld [vmem:[%s1 + $0xd0] sm:$0xff]
  %v53 = vld [vmem:[%s1 + $0xd8] sm:$0xff]
  %v54 = vld [vmem:[%s1 + $0xe0] sm:$0xff]
  %v55 = vld [vmem:[%s1 + $0xe8] sm:$0xff]
  %v56 = vld [vmem:[%s1 + $0xf0] sm:$0xff]
  %v57 = vld [vmem:[%s1 + $0xf8] sm:$0xff]
  %58 = vmatpush.msra.mxu0 %v41
  %59 = vmatpush.msra.mxu0 %v40
  %60 = vmatpush.msra.mxu0 %v39
  %61 = vmatpush.msra.mxu0 %v38
  %62 = vmatpush.msra.mxu0 %v37
  %63 = vmatpush.msra.mxu0 %v36
  %64 = vmatpush.msra.mxu0 %v35
  %65 = vmatpush.msra.mxu0 %v34
  %66 = vmatpush.msra.mxu0 %v33
  %67 = vmatpush.msra.mxu0 %v32
  %68 = vmatpush.msra.mxu0 %v31
  %69 = vmatpush.msra.mxu0 %v30
  %70 = vmatpush.msra.mxu0 %v29
  %71 = vmatpush.msra.mxu0 %v28
  %72 = vmatpush.msra.mxu0 %v27
  %73 = vmatpush.msra.mxu0 %v26
  %74 = vmatmul.f32.gmra.mxu0 %v24
  %v75 = vpop.f32.mrf.mxu0
  %v76 = vadd.f32 0.0, %v75
  %77 = vdwg.mxu0
  %78 = vmatpush.msra.mxu0 %v57
  %79 = vmatpush.msra.mxu0 %v56
  %80 = vmatpush.msra.mxu0 %v55
  %81 = vmatpush.msra.mxu0 %v54
  %82 = vmatpush.msra.mxu0 %v53
  %83 = vmatpush.msra.mxu0 %v52
  %84 = vmatpush.msra.mxu0 %v51
  %85 = vmatpush.msra.mxu0 %v50
  %86 = vmatpush.msra.mxu0 %v49
  %87 = vmatpush.msra.mxu0 %v48
  %88 = vmatpush.msra.mxu0 %v47
  %89 = vmatpush.msra.mxu0 %v46
  %90 = vmatpush.msra.mxu0 %v45
  %91 = vmatpush.msra.mxu0 %v44
  %92 = vmatpush.msra.mxu0 %v43
  %93 = vmatpush.msra.mxu0 %v42
  %94 = vmatmul.f32.gmra.mxu0 %v25
  %v95 = vpop.f32.mrf.mxu0
  %v96 = vadd.f32 %v76, %v95
  %97 = vdwg.mxu0
  %98 = vxpose.xlu0.b32.start [1/16] %v24, 128
  %99 = vxpose.xlu0.b32.cont [2/16] 0.0, 128
  %100 = vxpose.xlu0.b32.cont [3/16] 0.0, 128
  %101 = vxpose.xlu0.b32.cont [4/16] 0.0, 128
  %102 = vxpose.xlu0.b32.cont [5/16] 0.0, 128
  %103 = vxpose.xlu0.b32.cont [6/16] 0.0, 128
  %104 = vxpose.xlu0.b32.cont [7/16] 0.0, 128
  %105 = vxpose.xlu0.b32.cont [8/16] 0.0, 128
  %106 = vxpose.xlu0.b32.cont [9/16] 0.0, 128
  %107 = vxpose.xlu0.b32.cont [10/16] 0.0, 128
  %108 = vxpose.xlu0.b32.cont [11/16] 0.0, 128
  %109 = vxpose.xlu0.b32.cont [12/16] 0.0, 128
  %110 = vxpose.xlu0.b32.cont [13/16] 0.0, 128
  %111 = vxpose.xlu0.b32.cont [14/16] 0.0, 128
  %112 = vxpose.xlu0.b32.cont [15/16] 0.0, 128
  %113 = vxpose.xlu0.b32.end [16/16] 0.0, 128
  %v114 = vpop.trf.xlu0
  %v115 = vpop.trf.xlu0
  %v116 = vpop.trf.xlu0
  %v117 = vpop.trf.xlu0
  %v118 = vpop.trf.xlu0
  %v119 = vpop.trf.xlu0
  %v120 = vpop.trf.xlu0
  %v121 = vpop.trf.xlu0
  %v122 = vpop.trf.xlu0
  %v123 = vpop.trf.xlu0
  %v124 = vpop.trf.xlu0
  %v125 = vpop.trf.xlu0
  %v126 = vpop.trf.xlu0
  %v127 = vpop.trf.xlu0
  %v128 = vpop.trf.xlu0
  %v129 = vpop.trf.xlu0
  %130 = vxpose.xlu0.b32.start [1/16] %v25, 128
  %131 = vxpose.xlu0.b32.cont [2/16] 0.0, 128
  %132 = vxpose.xlu0.b32.cont [3/16] 0.0, 128
  %133 = vxpose.xlu0.b32.cont [4/16] 0.0, 128
  %134 = vxpose.xlu0.b32.cont [5/16] 0.0, 128
  %135 = vxpose.xlu0.b32.cont [6/16] 0.0, 128
  %136 = vxpose.xlu0.b32.cont [7/16] 0.0, 128
  %137 = vxpose.xlu0.b32.cont [8/16] 0.0, 128
  %138 = vxpose.xlu0.b32.cont [9/16] 0.0, 128
  %139 = vxpose.xlu0.b32.cont [10/16] 0.0, 128
  %140 = vxpose.xlu0.b32.cont [11/16] 0.0, 128
  %141 = vxpose.xlu0.b32.cont [12/16] 0.0, 128
  %142 = vxpose.xlu0.b32.cont [13/16] 0.0, 128
  %143 = vxpose.xlu0.b32.cont [14/16] 0.0, 128
  %144 = vxpose.xlu0.b32.cont [15/16] 0.0, 128
  %145 = vxpose.xlu0.b32.end [16/16] 0.0, 128
  %v146 = vpop.trf.xlu0
  %v147 = vpop.trf.xlu0
  %v148 = vpop.trf.xlu0
  %v149 = vpop.trf.xlu0
  %v150 = vpop.trf.xlu0
  %v151 = vpop.trf.xlu0
  %v152 = vpop.trf.xlu0
  %v153 = vpop.trf.xlu0
  %v154 = vpop.trf.xlu0
  %v155 = vpop.trf.xlu0
  %v156 = vpop.trf.xlu0
  %v157 = vpop.trf.xlu0
  %v158 = vpop.trf.xlu0
  %v159 = vpop.trf.xlu0
  %v160 = vpop.trf.xlu0
  %v161 = vpop.trf.xlu0
  %vm162 = vcmask 64512
  %v164 = vsel %vm162, %v114, 0
  %v167 = vsel %vm162, %v115, 0
  %v170 = vsel %vm162, %v116, 0
  %v173 = vsel %vm162, %v117, 0
  %v176 = vsel %vm162, %v118, 0
  %v179 = vsel %vm162, %v119, 0
  %v182 = vsel %vm162, %v120, 0
  %v185 = vsel %vm162, %v121, 0
  %v188 = vsel %vm162, %v122, 0
  %v191 = vsel %vm162, %v123, 0
  %v194 = vsel %vm162, %v124, 0
  %v197 = vsel %vm162, %v125, 0
  %v200 = vsel %vm162, %v126, 0
  %v203 = vsel %vm162, %v127, 0
  %v206 = vsel %vm162, %v128, 0
  %v209 = vsel %vm162, %v129, 0
  %v212 = vsel %vm162, %v146, 0
  %v215 = vsel %vm162, %v147, 0
  %v218 = vsel %vm162, %v148, 0
  %v221 = vsel %vm162, %v149, 0
  %v224 = vsel %vm162, %v150, 0
  %v227 = vsel %vm162, %v151, 0
  %v230 = vsel %vm162, %v152, 0
  %v233 = vsel %vm162, %v153, 0
  %v236 = vsel %vm162, %v154, 0
  %v239 = vsel %vm162, %v155, 0
  %v242 = vsel %vm162, %v156, 0
  %v245 = vsel %vm162, %v157, 0
  %v248 = vsel %vm162, %v158, 0
  %v251 = vsel %vm162, %v159, 0
  %v254 = vsel %vm162, %v160, 0
  %v257 = vsel %vm162, %v161, 0
  %259 = vmatpush.msra.mxu0 0.0
  %260 = vmatpush.msra.mxu0 0.0
  %261 = vmatpush.msra.mxu0 0.0
  %262 = vmatpush.msra.mxu0 0.0
  %263 = vmatpush.msra.mxu0 0.0
  %264 = vmatpush.msra.mxu0 0.0
  %265 = vmatpush.msra.mxu0 0.0
  %266 = vmatpush.msra.mxu0 0.0
  %267 = vmatpush.msra.mxu0 0.0
  %268 = vmatpush.msra.mxu0 0.0
  %269 = vmatpush.msra.mxu0 0.0
  %270 = vmatpush.msra.mxu0 0.0
  %271 = vmatpush.msra.mxu0 0.0
  %272 = vmatpush.msra.mxu0 0.0
  %273 = vmatpush.msra.mxu0 0.0
  %274 = vmatpush.msra.mxu0 %v96
  %275 = vmatmul.f32.gmra.mxu0 %v164
  %v276 = vpop.f32.mrf.mxu0
  %v277 = vadd.f32 0.0, %v276
  %278 = vmatmul.f32.gmra.mxu0 %v167
  %v279 = vpop.f32.mrf.mxu0
  %v280 = vadd.f32 0.0, %v279
  %281 = vmatmul.f32.gmra.mxu0 %v170
  %v282 = vpop.f32.mrf.mxu0
  %v283 = vadd.f32 0.0, %v282
  %284 = vmatmul.f32.gmra.mxu0 %v173
  %v285 = vpop.f32.mrf.mxu0
  %v286 = vadd.f32 0.0, %v285
  %287 = vmatmul.f32.gmra.mxu0 %v176
  %v288 = vpop.f32.mrf.mxu0
  %v289 = vadd.f32 0.0, %v288
  %290 = vmatmul.f32.gmra.mxu0 %v179
  %v291 = vpop.f32.mrf.mxu0
  %v292 = vadd.f32 0.0, %v291
  %293 = vmatmul.f32.gmra.mxu0 %v182
  %v294 = vpop.f32.mrf.mxu0
  %v295 = vadd.f32 0.0, %v294
  %296 = vmatmul.f32.gmra.mxu0 %v185
  %v297 = vpop.f32.mrf.mxu0
  %v298 = vadd.f32 0.0, %v297
  %299 = vmatmul.f32.gmra.mxu0 %v188
  %v300 = vpop.f32.mrf.mxu0
  %v301 = vadd.f32 0.0, %v300
  %302 = vmatmul.f32.gmra.mxu0 %v191
  %v303 = vpop.f32.mrf.mxu0
  %v304 = vadd.f32 0.0, %v303
  %305 = vmatmul.f32.gmra.mxu0 %v194
  %v306 = vpop.f32.mrf.mxu0
  %v307 = vadd.f32 0.0, %v306
  %308 = vmatmul.f32.gmra.mxu0 %v197
  %v309 = vpop.f32.mrf.mxu0
  %v310 = vadd.f32 0.0, %v309
  %311 = vmatmul.f32.gmra.mxu0 %v200
  %v312 = vpop.f32.mrf.mxu0
  %v313 = vadd.f32 0.0, %v312
  %314 = vmatmul.f32.gmra.mxu0 %v203
  %v315 = vpop.f32.mrf.mxu0
  %v316 = vadd.f32 0.0, %v315
  %317 = vmatmul.f32.gmra.mxu0 %v206
  %v318 = vpop.f32.mrf.mxu0
  %v319 = vadd.f32 0.0, %v318
  %320 = vmatmul.f32.gmra.mxu0 %v209
  %v321 = vpop.f32.mrf.mxu0
  %v322 = vadd.f32 0.0, %v321
  %323 = vmatmul.f32.gmra.mxu0 %v212
  %v324 = vpop.f32.mrf.mxu0
  %v325 = vadd.f32 0.0, %v324
  %326 = vmatmul.f32.gmra.mxu0 %v215
  %v327 = vpop.f32.mrf.mxu0
  %v328 = vadd.f32 0.0, %v327
  %329 = vmatmul.f32.gmra.mxu0 %v218
  %v330 = vpop.f32.mrf.mxu0
  %v331 = vadd.f32 0.0, %v330
  %332 = vmatmul.f32.gmra.mxu0 %v221
  %v333 = vpop.f32.mrf.mxu0
  %v334 = vadd.f32 0.0, %v333
  %335 = vmatmul.f32.gmra.mxu0 %v224
  %v336 = vpop.f32.mrf.mxu0
  %v337 = vadd.f32 0.0, %v336
  %338 = vmatmul.f32.gmra.mxu0 %v227
  %v339 = vpop.f32.mrf.mxu0
  %v340 = vadd.f32 0.0, %v339
  %341 = vmatmul.f32.gmra.mxu0 %v230
  %v342 = vpop.f32.mrf.mxu0
  %v343 = vadd.f32 0.0, %v342
  %344 = vmatmul.f32.gmra.mxu0 %v233
  %v345 = vpop.f32.mrf.mxu0
  %v346 = vadd.f32 0.0, %v345
  %347 = vmatmul.f32.gmra.mxu0 %v236
  %v348 = vpop.f32.mrf.mxu0
  %v349 = vadd.f32 0.0, %v348
  %350 = vmatmul.f32.gmra.mxu0 %v239
  %v351 = vpop.f32.mrf.mxu0
  %v352 = vadd.f32 0.0, %v351
  %353 = vmatmul.f32.gmra.mxu0 %v242
  %v354 = vpop.f32.mrf.mxu0
  %v355 = vadd.f32 0.0, %v354
  %356 = vmatmul.f32.gmra.mxu0 %v245
  %v357 = vpop.f32.mrf.mxu0
  %v358 = vadd.f32 0.0, %v357
  %359 = vmatmul.f32.gmra.mxu0 %v248
  %v360 = vpop.f32.mrf.mxu0
  %v361 = vadd.f32 0.0, %v360
  %362 = vmatmul.f32.gmra.mxu0 %v251
  %v363 = vpop.f32.mrf.mxu0
  %v364 = vadd.f32 0.0, %v363
  %365 = vmatmul.f32.gmra.mxu0 %v254
  %v366 = vpop.f32.mrf.mxu0
  %v367 = vadd.f32 0.0, %v366
  %368 = vmatmul.f32.gmra.mxu0 %v257
  %v369 = vpop.f32.mrf.mxu0
  %v370 = vadd.f32 0.0, %v369
  %371 = vdwg.mxu0
  %v372 = vmax.f32 %v277, 0.0
  %v373 = vmax.f32 %v280, 0.0
  %v374 = vmax.f32 %v283, 0.0
  %v375 = vmax.f32 %v286, 0.0
  %v376 = vmax.f32 %v289, 0.0
  %v377 = vmax.f32 %v292, 0.0
  %v378 = vmax.f32 %v295, 0.0
  %v379 = vmax.f32 %v298, 0.0
  %v380 = vmax.f32 %v301, 0.0
  %v381 = vmax.f32 %v304, 0.0
  %v382 = vmax.f32 %v307, 0.0
  %v383 = vmax.f32 %v310, 0.0
  %v384 = vmax.f32 %v313, 0.0
  %v385 = vmax.f32 %v316, 0.0
  %v386 = vmax.f32 %v319, 0.0
  %v387 = vmax.f32 %v322, 0.0
  %v388 = vmax.f32 %v325, 0.0
  %v389 = vmax.f32 %v328, 0.0
  %v390 = vmax.f32 %v331, 0.0
  %v391 = vmax.f32 %v334, 0.0
  %v392 = vmax.f32 %v337, 0.0
  %v393 = vmax.f32 %v340, 0.0
  %v394 = vmax.f32 %v343, 0.0
  %v395 = vmax.f32 %v346, 0.0
  %v396 = vmax.f32 %v349, 0.0
  %v397 = vmax.f32 %v352, 0.0
  %v398 = vmax.f32 %v355, 0.0
  %v399 = vmax.f32 %v358, 0.0
  %v400 = vmax.f32 %v361, 0.0
  %v401 = vmax.f32 %v364, 0.0
  %v402 = vmax.f32 %v367, 0.0
  %v403 = vmax.f32 %v370, 0.0
  %vm404 = vcmask 31744
  %405 = vst.msk [vmem:[%s2] sm:$0xff] %vm404, %v372
  %406 = vst.msk [vmem:[%s2 + $0x8] sm:$0xff] %vm404, %v373
  %407 = vst.msk [vmem:[%s2 + $0x10] sm:$0xff] %vm404, %v374
  %408 = vst.msk [vmem:[%s2 + $0x18] sm:$0xff] %vm404, %v375
  %409 = vst.msk [vmem:[%s2 + $0x20] sm:$0xff] %vm404, %v376
  %410 = vst.msk [vmem:[%s2 + $0x28] sm:$0xff] %vm404, %v377
  %411 = vst.msk [vmem:[%s2 + $0x30] sm:$0xff] %vm404, %v378
  %412 = vst.msk [vmem:[%s2 + $0x38] sm:$0xff] %vm404, %v379
  %413 = vst.msk [vmem:[%s2 + $0x40] sm:$0xff] %vm404, %v380
  %414 = vst.msk [vmem:[%s2 + $0x48] sm:$0xff] %vm404, %v381
  %415 = vst.msk [vmem:[%s2 + $0x50] sm:$0xff] %vm404, %v382
  %416 = vst.msk [vmem:[%s2 + $0x58] sm:$0xff] %vm404, %v383
  %417 = vst.msk [vmem:[%s2 + $0x60] sm:$0xff] %vm404, %v384
  %418 = vst.msk [vmem:[%s2 + $0x68] sm:$0xff] %vm404, %v385
  %419 = vst.msk [vmem:[%s2 + $0x70] sm:$0xff] %vm404, %v386
  %420 = vst.msk [vmem:[%s2 + $0x78] sm:$0xff] %vm404, %v387
  %421 = vst.msk [vmem:[%s2 + $0x80] sm:$0xff] %vm404, %v388
  %422 = vst.msk [vmem:[%s2 + $0x88] sm:$0xff] %vm404, %v389
  %423 = vst.msk [vmem:[%s2 + $0x90] sm:$0xff] %vm404, %v390
  %424 = vst.msk [vmem:[%s2 + $0x98] sm:$0xff] %vm404, %v391
  %425 = vst.msk [vmem:[%s2 + $0xa0] sm:$0xff] %vm404, %v392
  %426 = vst.msk [vmem:[%s2 + $0xa8] sm:$0xff] %vm404, %v393
  %427 = vst.msk [vmem:[%s2 + $0xb0] sm:$0xff] %vm404, %v394
  %428 = vst.msk [vmem:[%s2 + $0xb8] sm:$0xff] %vm404, %v395
  %429 = vst.msk [vmem:[%s2 + $0xc0] sm:$0xff] %vm404, %v396
  %430 = vst.msk [vmem:[%s2 + $0xc8] sm:$0xff] %vm404, %v397
  %431 = vst.msk [vmem:[%s2 + $0xd0] sm:$0xff] %vm404, %v398
  %432 = vst.msk [vmem:[%s2 + $0xd8] sm:$0xff] %vm404, %v399
  %433 = vst.msk [vmem:[%s2 + $0xe0] sm:$0xff] %vm404, %v400
  %434 = vst.msk [vmem:[%s2 + $0xe8] sm:$0xff] %vm404, %v401
  %435 = vst.msk [vmem:[%s2 + $0xf0] sm:$0xff] %vm404, %v402
  %436 = vst.msk [vmem:[%s2 + $0xf8] sm:$0xff] %vm404, %v403
  // Predicated region
  $region10: #{tpu_custom_call.1} parent=0 // pred_check
    _
  $region11: #{tpu_custom_call.1} parent=0 // pred_check_branch
    %438 = sbr.rel (0) target = $region13
  $region12: #{tpu_custom_call.1} parent=0 // pred_region
    _
  $region13: #{tpu_custom_call.1} parent=0 // pred_fallthru
    _
  // Predicated region
  $region14: #{tpu_custom_call.1} parent=0 // pred_check
    _
  $region15: #{tpu_custom_call.1} parent=0 // pred_check_branch
    %440 = sbr.rel (0) target = $region17
  $region16: #{tpu_custom_call.1} parent=0 // pred_region
    _
  $region17: #{tpu_custom_call.1} parent=0 // pred_fallthru
    _

</llo_original>
